<compile_context>
chip_gen: v5e
topology: v5e:2x2
jax: 0.10.0
libtpu: 0.0.40
codegen_flags: <defaults>
</compile_context>

<pallas_src>
import jax
import jax.numpy as jnp
from jax.experimental import pallas as pl
from jax.experimental.pallas import tpu as pltpu


def _round_up(x, m):
    return ((x + m - 1) // m) * m


def _make_mlp_kernel(num_layers, hidden_activations, obs_dim, d_pad, action_dim):
    """Kernel for `num_layers` packed linear layers; last layer has no activation."""
    assert len(hidden_activations) == num_layers - 1, (
        "need exactly one hidden activation per hidden layer")

    def kernel(x_ref, p_ref, mu_ref):
        h = x_ref[...].astype(jnp.float32)                  # (tb, obs_dim) f32
        in_dim = obs_dim
        for l in range(num_layers):                         # static Python loop
            w = p_ref[l, 0:in_dim, :]                       # (in_dim, d_pad) bf16, static view
            b = p_ref[l, d_pad:d_pad + 1, :]                # (1, d_pad)      bf16 bias row
            h = jnp.dot(h.astype(jnp.bfloat16), w,
                        preferred_element_type=jnp.float32)  # MXU bf16 x bf16 -> f32
            h = h + b.astype(jnp.float32)
            if l < num_layers - 1:
                h = hidden_activations[l](h)                # f32 VPU/EUP
            in_dim = d_pad
        mu_ref[...] = h[:, :action_dim].astype(mu_ref.dtype)  # narrow (tb, act_dim) store

    return kernel


def pack_mlp_params(weights_and_biases, d_pad):
    """Pack [(w, b), ...] (w: [in, out], b: [out]) into one (L, d_pad+16, d_pad) bf16 slab.

    Rows 0..d_pad-1 hold the zero-padded weight, row d_pad the zero-padded bias,
    remaining rows are zero (row count is a multiple of 16 so bf16 sublane-packing
    is tile-aligned).  Done once at parameter-setup time, not per forward call.
    """
    assert d_pad % 128 == 0
    rows = d_pad + 16
    slabs = []
    for w, b in weights_and_biases:
        fan_in, fan_out = w.shape
        slab = jnp.zeros((rows, d_pad), jnp.float32)
        slab = slab.at[:fan_in, :fan_out].set(jnp.asarray(w, jnp.float32))
        slab = slab.at[d_pad, :fan_out].set(jnp.asarray(b, jnp.float32).reshape(-1))
        slabs.append(slab.astype(jnp.bfloat16))
    return jnp.stack(slabs, axis=0)


def _choose_tiles(batch):
    """Pick (tile_rows, padded_rows): <=2048-row tiles, >=2 grid steps when B > 8
    (v7x megacore sharding), padding waste <= 8 rows per tile."""
    b8 = _round_up(max(batch, 1), 8)
    tb_cap = 2048
    if b8 <= 8:
        ntiles = 1
    else:
        ntiles = max(2, -(-b8 // tb_cap))
    tb = _round_up(-(-b8 // ntiles), 8)
    return tb, ntiles * tb


def actor_prob_forward(observation, packed_params, sigma_param,
                       hidden_activations, action_dim):
    """observation: [B, obs_dim] f32.  Returns (mu [B, action_dim], sigma [action_dim])."""
    observation = jnp.asarray(observation, jnp.float32)
    B, obs_dim = observation.shape
    num_layers, rows, d_pad = packed_params.shape
    assert rows == d_pad + 16

    tb, b_pad = _choose_tiles(B)
    obs_p = observation if b_pad == B else jnp.pad(observation, ((0, b_pad - B), (0, 0)))

    kernel = _make_mlp_kernel(num_layers, hidden_activations, obs_dim, d_pad, action_dim)

    mu_padded = pl.pallas_call(
        kernel,
        out_shape=jax.ShapeDtypeStruct((b_pad, action_dim), jnp.float32),
        grid=(b_pad // tb,),
        in_specs=[
            # obs tile: last dim == full extent -> no lane padding needed.
            pl.BlockSpec((tb, obs_dim), lambda i: (i, 0)),
            # whole parameter slab, constant block index -> DMA'd once.
            pl.BlockSpec((num_layers, rows, d_pad), lambda i: (0, 0, 0)),
        ],
        out_specs=pl.BlockSpec((tb, action_dim), lambda i: (i, 0)),
        compiler_params=pltpu.CompilerParams(
            dimension_semantics=("parallel",)),
    )(obs_p, packed_params)

    mu = mu_padded[:B, :]
    # sigma is observation-independent: keep it out of the kernel entirely.
    sigma = jnp.exp(jnp.asarray(sigma_param, jnp.float32))
    return mu, sigma


if __name__ == "__main__":
    # Small shapes consistent with the module: obs_dim=16, hidden=[32, 32], act_dim=8.
    observation_dim = 16
    hidden_sizes = [32, 32]
    action_dim = 8
    batch = 8
    hidden_activations = [lambda x: jnp.maximum(x, 0.0), jnp.tanh]   # ReLU, Tanh

    key = jax.random.PRNGKey(0)
    key, k_obs = jax.random.split(key)
    observation = jax.random.normal(k_obs, (batch, observation_dim), jnp.float32)

    # Deterministic init mimicking torch.nn.Linear's default uniform range.
    sizes = [observation_dim] + hidden_sizes + [action_dim]
    raw = []
    for fan_in, fan_out in zip(sizes[:-1], sizes[1:]):
        key, kw, kb = jax.random.split(key, 3)
        bound = 1.0 / float(fan_in) ** 0.5
        w = jax.random.uniform(kw, (fan_in, fan_out), jnp.float32, -bound, bound)
        b = jax.random.uniform(kb, (fan_out,), jnp.float32, -bound, bound)
        raw.append((w, b))
    key, ks = jax.random.split(key)
    # torch.nn.Parameter(torch.empty(action_dim)) is uninitialized; use a small normal.
    sigma_p = 0.1 * jax.random.normal(ks, (action_dim,), jnp.float32)

    d_pad = _round_up(max(sizes), 128)
    packed = pack_mlp_params(raw, d_pad)   # packed once, outside the per-step forward

    mu, sigma = actor_prob_forward(observation, packed, sigma_p,
                                   hidden_activations, action_dim)
    jax.block_until_ready((mu, sigma))

    # Pure-JAX f32 reference of the same forward.
    h = observation
    for l, (w, b) in enumerate(raw):
        h = h @ w + b
        if l < len(raw) - 1:
            h = hidden_activations[l](h)
    mu_ref = h
    sigma_ref = jnp.exp(sigma_p)

    assert mu.shape == (batch, action_dim) and sigma.shape == (action_dim,)
    # Kernel uses bf16 weights/inputs on the MXU (f32 accumulation) -> ~1e-3 level error.
    assert jnp.allclose(mu, mu_ref, atol=2e-2), "mu mismatch"
    assert jnp.allclose(sigma, sigma_ref, atol=1e-6), "sigma mismatch"
    print("KERNEL_OK")
</pallas_src>

<mosaic_0001>
module attributes {stable_mosaic.version = 11 : i64} {
  func.func @kernel(%arg0: i32, %arg1: memref<8x16xf32, #tpu.memory_space<vmem>>, %arg2: memref<3x144x128xbf16, #tpu.memory_space<vmem>>, %arg3: memref<8x8xf32, #tpu.memory_space<vmem>>) attributes {dimension_semantics = [#tpu.dimension_semantics<parallel>], iteration_bounds = array<i64: 1>, scalar_prefetch = 0 : i64, scratch_operands = 0 : i64, tpu.core_type = #tpu.core_type<tc>, window_params = [{transform_indices = @transform_0, window_bounds = array<i64: 8, 16>}, {pipeline_mode = #tpu.pipeline_mode<synchronous>, transform_indices = @transform_1, window_bounds = array<i64: 3, 144, 128>}, {transform_indices = @transform_2, window_bounds = array<i64: 8, 8>}]} {
    %c0 = arith.constant 0 : index
    %c0_0 = arith.constant 0 : index
    %0 = vector.load %arg1[%c0, %c0_0] : memref<8x16xf32, #tpu.memory_space<vmem>>, vector<8x16xf32>
    %c0_1 = arith.constant 0 : index
    %c0_2 = arith.constant 0 : index
    %c0_3 = arith.constant 0 : index
    %1 = vector.load %arg2[%c0_1, %c0_2, %c0_3] : memref<3x144x128xbf16, #tpu.memory_space<vmem>>, vector<1x16x128xbf16>
    %2 = vector.shape_cast %1 : vector<1x16x128xbf16> to vector<16x128xbf16>
    %c0_4 = arith.constant 0 : index
    %c128 = arith.constant 128 : index
    %c0_5 = arith.constant 0 : index
    %3 = vector.load %arg2[%c0_4, %c128, %c0_5] : memref<3x144x128xbf16, #tpu.memory_space<vmem>>, vector<1x1x128xbf16>
    %4 = vector.shape_cast %3 : vector<1x1x128xbf16> to vector<1x128xbf16>
    %5 = arith.truncf %0 : vector<8x16xf32> to vector<8x16xbf16>
    %cst = arith.constant dense<0.000000e+00> : vector<8x128xf32>
    %6 = tpu.matmul %5, %2, %cst {dimension_numbers = #tpu.dot_dimension_numbers<[1], [0], [0], [1], [0, 0, 1, 1], [], []>} : vector<8x16xbf16>, vector<16x128xbf16>, vector<8x128xf32> -> vector<8x128xf32>
    %7 = arith.extf %4 : vector<1x128xbf16> to vector<1x128xf32>
    %8 = vector.broadcast %7 : vector<1x128xf32> to vector<8x128xf32>
    %9 = arith.addf %6, %8 : vector<8x128xf32>
    %cst_6 = arith.constant 0.000000e+00 : f32
    %10 = vector.broadcast %cst_6 : f32 to vector<8x128xf32>
    %11 = arith.maximumf %9, %10 : vector<8x128xf32>
    %c1 = arith.constant 1 : index
    %c0_7 = arith.constant 0 : index
    %c0_8 = arith.constant 0 : index
    %12 = vector.load %arg2[%c1, %c0_7, %c0_8] : memref<3x144x128xbf16, #tpu.memory_space<vmem>>, vector<1x128x128xbf16>
    %13 = vector.shape_cast %12 : vector<1x128x128xbf16> to vector<128x128xbf16>
    %c1_9 = arith.constant 1 : index
    %c128_10 = arith.constant 128 : index
    %c0_11 = arith.constant 0 : index
    %14 = vector.load %arg2[%c1_9, %c128_10, %c0_11] : memref<3x144x128xbf16, #tpu.memory_space<vmem>>, vector<1x1x128xbf16>
    %15 = vector.shape_cast %14 : vector<1x1x128xbf16> to vector<1x128xbf16>
    %16 = arith.truncf %11 : vector<8x128xf32> to vector<8x128xbf16>
    %cst_12 = arith.constant dense<0.000000e+00> : vector<8x128xf32>
    %17 = tpu.matmul %16, %13, %cst_12 {dimension_numbers = #tpu.dot_dimension_numbers<[1], [0], [0], [1], [0, 0, 1, 1], [], []>} : vector<8x128xbf16>, vector<128x128xbf16>, vector<8x128xf32> -> vector<8x128xf32>
    %18 = arith.extf %15 : vector<1x128xbf16> to vector<1x128xf32>
    %19 = vector.broadcast %18 : vector<1x128xf32> to vector<8x128xf32>
    %20 = arith.addf %17, %19 : vector<8x128xf32>
    %21 = math.tanh %20 : vector<8x128xf32>
    %c2 = arith.constant 2 : index
    %c0_13 = arith.constant 0 : index
    %c0_14 = arith.constant 0 : index
    %22 = vector.load %arg2[%c2, %c0_13, %c0_14] : memref<3x144x128xbf16, #tpu.memory_space<vmem>>, vector<1x128x128xbf16>
    %23 = vector.shape_cast %22 : vector<1x128x128xbf16> to vector<128x128xbf16>
    %c2_15 = arith.constant 2 : index
    %c128_16 = arith.constant 128 : index
    %c0_17 = arith.constant 0 : index
    %24 = vector.load %arg2[%c2_15, %c128_16, %c0_17] : memref<3x144x128xbf16, #tpu.memory_space<vmem>>, vector<1x1x128xbf16>
    %25 = vector.shape_cast %24 : vector<1x1x128xbf16> to vector<1x128xbf16>
    %26 = arith.truncf %21 : vector<8x128xf32> to vector<8x128xbf16>
    %cst_18 = arith.constant dense<0.000000e+00> : vector<8x128xf32>
    %27 = tpu.matmul %26, %23, %cst_18 {dimension_numbers = #tpu.dot_dimension_numbers<[1], [0], [0], [1], [0, 0, 1, 1], [], []>} : vector<8x128xbf16>, vector<128x128xbf16>, vector<8x128xf32> -> vector<8x128xf32>
    %28 = arith.extf %25 : vector<1x128xbf16> to vector<1x128xf32>
    %29 = vector.broadcast %28 : vector<1x128xf32> to vector<8x128xf32>
    %30 = arith.addf %27, %29 : vector<8x128xf32>
    %31 = vector.extract_strided_slice %30 {offsets = [0, 0], sizes = [8, 8], strides = [1, 1]} : vector<8x128xf32> to vector<8x8xf32>
    %c0_19 = arith.constant 0 : index
    %c0_20 = arith.constant 0 : index
    %32 = vector.load %arg3[%c0_19, %c0_20] : memref<8x8xf32, #tpu.memory_space<vmem>>, vector<8x8xf32>
    tpu.vector_store %arg3[%c0_19, %c0_20], %31 {strides = array<i32>} : memref<8x8xf32, #tpu.memory_space<vmem>>, vector<8x8xf32>,
    return
  }
  func.func @transform_0(%arg0: i32) -> (i32, i32) {
    %c0_i32 = arith.constant 0 : i32
    %c0_i32_0 = arith.constant 0 : i32
    return %arg0, %c0_i32 : i32, i32
  }
  func.func @transform_1(%arg0: i32) -> (i32, i32, i32) {
    %c0_i32 = arith.constant 0 : i32
    %c0_i32_0 = arith.constant 0 : i32
    %c0_i32_1 = arith.constant 0 : i32
    %c0_i32_2 = arith.constant 0 : i32
    return %c0_i32, %c0_i32_0, %c0_i32_1 : i32, i32, i32
  }
  func.func @transform_2(%arg0: i32) -> (i32, i32) {
    %c0_i32 = arith.constant 0 : i32
    %c0_i32_0 = arith.constant 0 : i32
    return %arg0, %c0_i32 : i32, i32
  }
}

</mosaic_0001>

<llo_original>
// kernel: tpu_custom_call.1
$region0: #{tpu_custom_call.1}
  #allocation0 [shape = 'u32[]', space=smem, size = 0x4, offset = 0x4, fixed_abs, tag = 'smem constant byte address 0x4 - core index']
  #allocation1 [shape = 'u32[72,128]{1,0:T(1,128)}', space=vmem, size = 0x9000, scoped, tag = 'internal scratch']
  %s0 = inlined_call_operand.hbm [shape: f32[8,16], index: 0, kind: input, shape index: {}]
  %s1 = inlined_call_operand.hbm [shape: bf16[3,144,128], index: 1, kind: input, shape index: {}]
  %s2 = inlined_call_operand.hbm [shape: f32[8,8], index: 2, kind: output, shape index: {}]
  %s3 = sld [smem:[#allocation0]]
  $region26: #{tpu_custom_call.1} parent=0
    _
  %s5 = ssub.s32 1, %s3
  %s6 = scalar_select 0, %s5, %s3
  $region1: #{tpu_custom_call.1} parent=0
    #allocation2 [shape = 'u8[4096]{0}', space=vmem, size = 0x1000, scoped, tag = 'input window, operand 0, single buffered']
    #allocation3 [shape = 's32[1]{0}', space=sflag, size = 0x4, scoped, tag = 'scoped memory for tpu_custom_call.1']
    #allocation4 [shape = 's32[1]{0}', space=sflag, size = 0x4, scoped, tag = 'scoped memory for tpu_custom_call.1']
    #allocation5 [shape = 'u8[110592]{0}', space=vmem, size = 0x1b000, scoped, tag = 'input window, operand 1, single buffered']
    #allocation6 [shape = 's32[1]{0}', space=sflag, size = 0x4, scoped, tag = 'scoped memory for tpu_custom_call.1']
    #allocation7 [shape = 'u8[4096]{0}', space=vmem, size = 0x1000, scoped, tag = 'output window, operand 0, single buffered']
    %7 = vsyncpa [#allocation3], 0
    %8 = vsyncpa [#allocation6], 0
    %9 = vsyncpa [#allocation4], 0
    // Predicated region
    $region2: #{tpu_custom_call.1} parent=1 // pred_check
      _
    $region3: #{tpu_custom_call.1} parent=1 // pred_check_branch
      %11 = sbr.rel (0) target = $region5
    $region4: #{tpu_custom_call.1} parent=1 // pred_region
      %13 = vsyncadd [#allocation3], 0
      %s15 = sshll.u32 %s0, 4
      %s16 = int_to_ptr.hbm [resolvable:$true] %s15
      %s17 = sshll.u32 [#allocation2], 4
      %s18 = int_to_ptr.vmem [resolvable:$true] %s17
      %20 = dma.hbm_to_vmem [thread:$0]  %s16, 128, %s18, [#allocation3]
    $region5: #{tpu_custom_call.1} parent=1 // pred_fallthru
      _
    // Predicated region
    $region6: #{tpu_custom_call.1} parent=1 // pred_check
      _
    $region7: #{tpu_custom_call.1} parent=1 // pred_check_branch
      %22 = sbr.rel (0) target = $region9
    $region8: #{tpu_custom_call.1} parent=1 // pred_region
      %24 = vsyncadd [#allocation6], 0
      %s25 = sshll.u32 %s1, 4
      %s26 = int_to_ptr.hbm [resolvable:$true] %s25
      %s27 = sshll.u32 [#allocation5], 4
      %s28 = int_to_ptr.vmem [resolvable:$true] %s27
      %33 = dma.hbm_to_vmem [thread:$0]  %s26, 3456, %s28, [#allocation6], 64, 64, 4
    $region9: #{tpu_custom_call.1} parent=1 // pred_fallthru
      _
    // Predicated region
    $region10: #{tpu_custom_call.1} parent=1 // pred_check
      _
    $region11: #{tpu_custom_call.1} parent=1 // pred_check_branch
      %35 = sbr.rel (0) target = $region13
    $region12: #{tpu_custom_call.1} parent=1 // pred_region
      %37 = dma.done [#allocation3], 128
    $region13: #{tpu_custom_call.1} parent=1 // pred_fallthru
      _
    // Predicated region
    $region14: #{tpu_custom_call.1} parent=1 // pred_check
      _
    $region15: #{tpu_custom_call.1} parent=1 // pred_check_branch
      %39 = sbr.rel (0) target = $region17
    $region16: #{tpu_custom_call.1} parent=1 // pred_region
      %41 = dma.done [#allocation6], 3456
    $region17: #{tpu_custom_call.1} parent=1 // pred_fallthru
      _
    %v43 = vld [vmem:[#allocation2] sm:$0xff]
    %v44 = vld [vmem:[#allocation5] sm:$0xf]
    %v45 = vld [vmem:[#allocation5 + $0x4] sm:$0xf]
    %v46 = vld [vmem:[#allocation5 + $0x40] sm:$0x1]
    %v47 = vpack.c.bf16 %v43, %v43
    %v48 = vunpack.c.l.bf16 %v46
    %v49 = vperm.slane %v48, 0
    %v52 = vunpack.c.l.b16 %v44
    %v53 = vunpack.c.l.b16 %v45
    %v54 = vpack.c.b16 %v53, %v52
    %vm56 = vcmask 130048
    %v58 = vsel %vm56, %v47, 0
    %60 = vmatpush.bf16.msra.mxu0 0
    %61 = vmatpush.bf16.msra.mxu0 0
    %62 = vmatpush.bf16.msra.mxu0 0
    %63 = vmatpush.bf16.msra.mxu0 0
    %64 = vmatpush.bf16.msra.mxu0 0
    %65 = vmatpush.bf16.msra.mxu0 0
    %66 = vmatpush.bf16.msra.mxu0 0
    %67 = vmatpush.bf16.msra.mxu0 %v54
    %68 = vmatmul.bf16.gmra.mxu0 %v58
    %v69 = vpop.f32.mrf.mxu0
    %v70 = vadd.f32 %v49, %v69
    %v71 = vpop.f32.mrf.mxu0
    %72 = vdwg.mxu0
    %v73 = vmax.f32 %v70, 0.0
    %s74 = scalar_lea.vmem [#allocation5], 72
    %v75 = vld [vmem:[%s74] sm:$0xf]
    %v76 = vld [vmem:[%s74 + $0x4] sm:$0xf]
    %v77 = vld [vmem:[%s74 + $0x8] sm:$0xf]
    %v78 = vld [vmem:[%s74 + $0xc] sm:$0xf]
    %v79 = vld [vmem:[%s74 + $0x10] sm:$0xf]
    %v80 = vld [vmem:[%s74 + $0x14] sm:$0xf]
    %v81 = vld [vmem:[%s74 + $0x18] sm:$0xf]
    %v82 = vld [vmem:[%s74 + $0x1c] sm:$0xf]
    %v83 = vld [vmem:[%s74 + $0x20] sm:$0xf]
    %v84 = vld [vmem:[%s74 + $0x24] sm:$0xf]
    %v85 = vld [vmem:[%s74 + $0x28] sm:$0xf]
    %v86 = vld [vmem:[%s74 + $0x2c] sm:$0xf]
    %v87 = vld [vmem:[%s74 + $0x30] sm:$0xf]
    %v88 = vld [vmem:[%s74 + $0x34] sm:$0xf]
    %v89 = vld [vmem:[%s74 + $0x38] sm:$0xf]
    %v90 = vld [vmem:[%s74 + $0x3c] sm:$0xf]
    %v91 = vld [vmem:[%s74 + $0x40] sm:$0x1]
    %v92 = vpack.c.bf16 %v73, %v73
    %v93 = vunpack.c.l.bf16 %v91
    %v94 = vperm.slane %v93, 0
    %v111 = vunpack.c.l.b16 %v75
    %v112 = vunpack.c.l.b16 %v76
    %v113 = vunpack.c.l.b16 %v77
    %v114 = vunpack.c.l.b16 %v78
    %v115 = vunpack.c.l.b16 %v79
    %v116 = vunpack.c.l.b16 %v80
    %v117 = vunpack.c.l.b16 %v81
    %v118 = vunpack.c.l.b16 %v82
    %v119 = vunpack.c.l.b16 %v83
    %v120 = vunpack.c.l.b16 %v84
    %v121 = vunpack.c.l.b16 %v85
    %v122 = vunpack.c.l.b16 %v86
    %v123 = vunpack.c.l.b16 %v87
    %v124 = vunpack.c.l.b16 %v88
    %v125 = vunpack.c.l.b16 %v89
    %v126 = vunpack.c.l.b16 %v90
    %v127 = vpack.c.b16 %v112, %v111
    %v128 = vpack.c.b16 %v114, %v113
    %v129 = vpack.c.b16 %v116, %v115
    %v130 = vpack.c.b16 %v118, %v117
    %v131 = vpack.c.b16 %v120, %v119
    %v132 = vpack.c.b16 %v122, %v121
    %v133 = vpack.c.b16 %v124, %v123
    %v134 = vpack.c.b16 %v126, %v125
    %143 = vmatpush.bf16.msra.mxu0 %v134
    %144 = vmatpush.bf16.msra.mxu0 %v133
    %145 = vmatpush.bf16.msra.mxu0 %v132
    %146 = vmatpush.bf16.msra.mxu0 %v131
    %147 = vmatpush.bf16.msra.mxu0 %v130
    %148 = vmatpush.bf16.msra.mxu0 %v129
    %149 = vmatpush.bf16.msra.mxu0 %v128
    %150 = vmatpush.bf16.msra.mxu0 %v127
    %151 = vmatmul.bf16.gmra.mxu0 %v92
    %v152 = vpop.f32.mrf.mxu0
    %v153 = vadd.f32 %v94, %v152
    %v154 = vpop.f32.mrf.mxu0
    %155 = vdwg.mxu0
    %v156 = vtanh.pop %v153
    %s157 = scalar_lea.vmem [#allocation5], 144
    %v158 = vld [vmem:[%s157] sm:$0xf]
    %v159 = vld [vmem:[%s157 + $0x4] sm:$0xf]
    %v160 = vld [vmem:[%s157 + $0x8] sm:$0xf]
    %v161 = vld [vmem:[%s157 + $0xc] sm:$0xf]
    %v162 = vld [vmem:[%s157 + $0x10] sm:$0xf]
    %v163 = vld [vmem:[%s157 + $0x14] sm:$0xf]
    %v164 = vld [vmem:[%s157 + $0x18] sm:$0xf]
    %v165 = vld [vmem:[%s157 + $0x1c] sm:$0xf]
    %v166 = vld [vmem:[%s157 + $0x20] sm:$0xf]
    %v167 = vld [vmem:[%s157 + $0x24] sm:$0xf]
    %v168 = vld [vmem:[%s157 + $0x28] sm:$0xf]
    %v169 = vld [vmem:[%s157 + $0x2c] sm:$0xf]
    %v170 = vld [vmem:[%s157 + $0x30] sm:$0xf]
    %v171 = vld [vmem:[%s157 + $0x34] sm:$0xf]
    %v172 = vld [vmem:[%s157 + $0x38] sm:$0xf]
    %v173 = vld [vmem:[%s157 + $0x3c] sm:$0xf]
    %v174 = vld [vmem:[%s157 + $0x40] sm:$0x1]
    %v175 = vpack.c.bf16 %v156, %v156
    %v176 = vunpack.c.l.bf16 %v174
    %v177 = vperm.slane %v176, 0
    %v194 = vunpack.c.l.b16 %v158
    %v195 = vunpack.c.l.b16 %v159
    %v196 = vunpack.c.l.b16 %v160
    %v197 = vunpack.c.l.b16 %v161
    %v198 = vunpack.c.l.b16 %v162
    %v199 = vunpack.c.l.b16 %v163
    %v200 = vunpack.c.l.b16 %v164
    %v201 = vunpack.c.l.b16 %v165
    %v202 = vunpack.c.l.b16 %v166
    %v203 = vunpack.c.l.b16 %v167
    %v204 = vunpack.c.l.b16 %v168
    %v205 = vunpack.c.l.b16 %v169
    %v206 = vunpack.c.l.b16 %v170
    %v207 = vunpack.c.l.b16 %v171
    %v208 = vunpack.c.l.b16 %v172
    %v209 = vunpack.c.l.b16 %v173
    %v210 = vpack.c.b16 %v195, %v194
    %v211 = vpack.c.b16 %v197, %v196
    %v212 = vpack.c.b16 %v199, %v198
    %v213 = vpack.c.b16 %v201, %v200
    %v214 = vpack.c.b16 %v203, %v202
    %v215 = vpack.c.b16 %v205, %v204
    %v216 = vpack.c.b16 %v207, %v206
    %v217 = vpack.c.b16 %v209, %v208
    %226 = vmatpush.bf16.msra.mxu0 %v217
    %227 = vmatpush.bf16.msra.mxu0 %v216
    %228 = vmatpush.bf16.msra.mxu0 %v215
    %229 = vmatpush.bf16.msra.mxu0 %v214
    %230 = vmatpush.bf16.msra.mxu0 %v213
    %231 = vmatpush.bf16.msra.mxu0 %v212
    %232 = vmatpush.bf16.msra.mxu0 %v211
    %233 = vmatpush.bf16.msra.mxu0 %v210
    %234 = vmatmul.bf16.gmra.mxu0 %v175
    %v235 = vpop.f32.mrf.mxu0
    %v236 = vadd.f32 %v177, %v235
    %v237 = vpop.f32.mrf.mxu0
    %238 = vdwg.mxu0
    %vm239 = vcmask 64512
    %240 = vst.msk [vmem:[#allocation7] sm:$0xff] %vm239, %v236
    // Predicated region
    $region18: #{tpu_custom_call.1} parent=1 // pred_check
      _
    $region19: #{tpu_custom_call.1} parent=1 // pred_check_branch
      %242 = sbr.rel (0) target = $region21
    $region20: #{tpu_custom_call.1} parent=1 // pred_region
      %244 = vsyncadd [#allocation4], 0
      %s246 = sshll.u32 [#allocation7], 4
      %s247 = int_to_ptr.vmem [resolvable:$true] %s246
      %s248 = sshll.u32 %s2, 4
      %s249 = int_to_ptr.hbm [resolvable:$true] %s248
      %251 = dma.vmem_to_hbm [thread:$0]  %s247, 128, %s249, [#allocation4]
    $region21: #{tpu_custom_call.1} parent=1 // pred_fallthru
      _
    // Predicated region
    $region22: #{tpu_custom_call.1} parent=1 // pred_check
      _
    $region23: #{tpu_custom_call.1} parent=1 // pred_check_branch
      %253 = sbr.rel (0) target = $region25
    $region24: #{tpu_custom_call.1} parent=1 // pred_region
      %255 = dma.done [#allocation4], 128
    $region25: #{tpu_custom_call.1} parent=1 // pred_fallthru
      _
    %256 = vsyncpa [#allocation3], 1
    %257 = vsyncpa [#allocation6], 1
    %258 = vsyncpa [#allocation4], 1

</llo_original>
